<compile_context>
chip_gen: v7x
topology: tpu7x:2x2x1
jax: 0.10.0
libtpu: 0.0.40
codegen_flags: <defaults>
</compile_context>

<pallas_src>
import functools

import jax
import jax.numpy as jnp
from jax import lax
from jax.experimental import pallas as pl
from jax.experimental.pallas import tpu as pltpu


_LANE = 128  # TPU lane width; each fused-weight segment is padded to this


def _attention_kernel(x_ref, w_ref, b_ref, o_ref, *, B, T, C, SEG):
    # x_ref: (B*T, C)     flattened tokens
    # w_ref: (C, 3*SEG)   fused, lane-padded, pre-transposed [Wk^T | s*Wq^T | Wv^T]
    # b_ref: (1, 3*SEG)   fused, lane-padded [bk | s*bq | bv]
    # o_ref: (B, T, C)
    x = x_ref[...]

    # Single fused projection on the MXU: (B*T, C) @ (C, 3*SEG) -> (B*T, 3*SEG)
    kqv = jnp.dot(x, w_ref[...], preferred_element_type=jnp.float32) + b_ref[...]

    # Segments start on 128-lane tile boundaries -> no XLU lane rolls for the
    # slices; T == 8 keeps the (B*T)->(B,T) reshape on a sublane-tile boundary.
    k = kqv[:, 0 * SEG:0 * SEG + C].reshape(B, T, C)
    q = kqv[:, 1 * SEG:1 * SEG + C].reshape(B, T, C)   # 1/sqrt(C) pre-folded on host
    v = kqv[:, 2 * SEG:2 * SEG + C].reshape(B, T, C)

    # Causal mask in-kernel (the module's buffer is torch.tril(ones)).
    # TODO(synk): kernel hard-codes tril(ones); a non-tril buffer or T > block_size
    # would need the mask streamed in instead.
    row = lax.broadcasted_iota(jnp.int32, (T, T), 0)
    col = lax.broadcasted_iota(jnp.int32, (T, T), 1)
    causal = (row >= col)[None, :, :]                  # (1, T, T), broadcast over B
    neg_big = jnp.float32(-1e30)                       # finite "-inf": never NaN

    # scores = k @ q^T (assignment variant; do NOT "fix" to q @ k^T),
    # batched over B in a single dot_general.
    scores = jnp.einsum("btc,bsc->bts", k, q,
                        preferred_element_type=jnp.float32)        # (B, T, T)
    masked = jnp.where(causal, scores, neg_big)

    # Softmax over the last dim, one pass for all batches.
    m = jnp.max(masked, axis=-1, keepdims=True)
    e = jnp.exp(masked - m)
    s = jnp.sum(e, axis=-1, keepdims=True)
    inv = pl.reciprocal(s, approx=True)                # EUP vrcp (off the VALU path)
    inv = inv * (2.0 - s * inv)                        # one Newton step -> f32 accuracy
    attn = e * inv

    out = jnp.einsum("bts,bsc->btc", attn, v,
                     preferred_element_type=jnp.float32)           # (B, T, C)

    # Single full-block store (no concatenate / intermediate copy).
    o_ref[...] = out.astype(o_ref.dtype)


def fuse_attention_params(wk, bk, wq, bq, wv, bv):
    """One-time (parameter-load-time) fusion of the three Linear layers.

    Returns (w_fused (C, 3*SEG), b_fused (1, 3*SEG)):
      * weights pre-transposed to (in, out) layout,
      * the 1/sqrt(layer_size) score scale folded into the Q segment,
      * each segment zero-padded to a 128-lane boundary so in-kernel k/q/v
        slices are tile-aligned.
    Cache the result; do NOT recompute per forward call.
    """
    C = wk.shape[0]
    seg = max(_LANE, ((C + _LANE - 1) // _LANE) * _LANE)
    scale = jnp.float32(1.0 / (C ** 0.5))
    pad_w = jnp.zeros((C, seg - C), jnp.float32)
    pad_b = jnp.zeros((seg - C,), jnp.float32)
    w_fused = jnp.concatenate(
        [wk.T, pad_w, wq.T * scale, pad_w, wv.T, pad_w], axis=1)       # (C, 3*SEG)
    b_fused = jnp.concatenate(
        [bk, pad_b, bq * scale, pad_b, bv, pad_b]).reshape(1, 3 * seg)  # (1, 3*SEG)
    return w_fused, b_fused


@jax.jit
def attention_forward(x, w_fused, b_fused):
    """x: (B, T, C) f32; w_fused/b_fused from fuse_attention_params (cached).

    Returns (1, B, T, C), matching the torch forward's broadcast-induced
    leading singleton (masked_fill with the (1,1,T,T) mask buffer).
    """
    B, T, C = x.shape
    seg = w_fused.shape[1] // 3

    kernel = functools.partial(_attention_kernel, B=B, T=T, C=C, SEG=seg)

    out = pl.pallas_call(
        kernel,
        out_shape=jax.ShapeDtypeStruct((B, T, C), jnp.float32),
        grid_spec=pltpu.PrefetchScalarGridSpec(
            num_scalar_prefetch=0,
            grid=(1,),                                   # whole (tiny) problem in one step
            in_specs=[
                pl.BlockSpec((B * T, C), lambda i: (0, 0)),       # x (flattened)
                pl.BlockSpec((C, 3 * seg), lambda i: (0, 0)),     # fused W^T (padded)
                pl.BlockSpec((1, 3 * seg), lambda i: (0, 0)),     # fused bias (padded)
            ],
            out_specs=pl.BlockSpec((B, T, C), lambda i: (0, 0, 0)),
        ),
        compiler_params=pltpu.CompilerParams(
            dimension_semantics=("arbitrary",)),
    )(x.reshape(B * T, C), w_fused, b_fused)

    return out[None, ...]


def attention_reference(x, wk, bk, wq, bq, wv, bv, mask_full):
    """Pure-JAX reference mirroring the PyTorch forward."""
    B, T, C = x.shape
    k = x @ wk.T + bk
    q = x @ wq.T + bq
    v = x @ wv.T + bv
    scores = jnp.matmul(k, jnp.swapaxes(q, 1, 2)) / (C ** 0.5)
    mask = mask_full[:T, :T]
    masked = jnp.where(mask == 0.0, -jnp.inf, scores)
    attn = jax.nn.softmax(masked, axis=-1)
    out = jnp.matmul(attn, v)
    return out[None, ...]


if __name__ == "__main__":
    layer_size = 32   # C
    block_size = 8    # max sequence length for the causal-mask buffer
    B, T, C = 2, 8, layer_size

    key = jax.random.PRNGKey(0)
    kx, kk, kbk, kq, kbq, kv, kbv = jax.random.split(key, 7)

    x = jax.random.normal(kx, (B, T, C), dtype=jnp.float32)

    # Deterministic synthetic Linear parameters (torch Linear: weight (C, C), bias (C,)).
    bound = 1.0 / (C ** 0.5)
    wk = jax.random.uniform(kk, (C, C), jnp.float32, -bound, bound)
    bk = jax.random.uniform(kbk, (C,), jnp.float32, -bound, bound)
    wq = jax.random.uniform(kq, (C, C), jnp.float32, -bound, bound)
    bq = jax.random.uniform(kbq, (C,), jnp.float32, -bound, bound)
    wv = jax.random.uniform(kv, (C, C), jnp.float32, -bound, bound)
    bv = jax.random.uniform(kbv, (C,), jnp.float32, -bound, bound)

    # Causal mask buffer: tril(ones(block_size, block_size)) — used by the reference.
    mask_full = jnp.tril(jnp.ones((block_size, block_size), jnp.float32))

    # One-time parameter fusion (cached; not part of the per-call path).
    w_fused, b_fused = fuse_attention_params(wk, bk, wq, bq, wv, bv)
    w_fused = jax.block_until_ready(w_fused)
    b_fused = jax.block_until_ready(b_fused)

    out = attention_forward(x, w_fused, b_fused)
    out = jax.block_until_ready(out)

    ref = attention_reference(x, wk, bk, wq, bq, wv, bv, mask_full)
    assert out.shape == (1, B, T, C), out.shape
    assert jnp.allclose(out, ref, atol=1e-5, rtol=1e-5), "mismatch vs reference"

    print("KERNEL_OK")
</pallas_src>

<mosaic_0001>
module attributes {stable_mosaic.version = 11 : i64} {
  func.func @_attention_kernel(%arg0: i32, %arg1: memref<16x32xf32, #tpu.memory_space<vmem>>, %arg2: memref<32x384xf32, #tpu.memory_space<vmem>>, %arg3: memref<1x384xf32, #tpu.memory_space<vmem>>, %arg4: memref<2x8x32xf32, #tpu.memory_space<vmem>>) attributes {dimension_semantics = [#tpu.dimension_semantics<arbitrary>], iteration_bounds = array<i64: 1>, scalar_prefetch = 0 : i64, scratch_operands = 0 : i64, tpu.core_type = #tpu.core_type<tc>, window_params = [{pipeline_mode = #tpu.pipeline_mode<synchronous>, transform_indices = @transform_0, window_bounds = array<i64: 16, 32>}, {pipeline_mode = #tpu.pipeline_mode<synchronous>, transform_indices = @transform_1, window_bounds = array<i64: 32, 384>}, {pipeline_mode = #tpu.pipeline_mode<synchronous>, transform_indices = @transform_2, window_bounds = array<i64: 1, 384>}, {pipeline_mode = #tpu.pipeline_mode<synchronous>, transform_indices = @transform_3, window_bounds = array<i64: 2, 8, 32>}]} {
    %c0 = arith.constant 0 : index
    %c0_0 = arith.constant 0 : index
    %0 = vector.load %arg1[%c0, %c0_0] : memref<16x32xf32, #tpu.memory_space<vmem>>, vector<16x32xf32>
    %c0_1 = arith.constant 0 : index
    %c0_2 = arith.constant 0 : index
    %1 = vector.load %arg2[%c0_1, %c0_2] : memref<32x384xf32, #tpu.memory_space<vmem>>, vector<32x384xf32>
    %cst = arith.constant dense<0.000000e+00> : vector<16x384xf32>
    %2 = tpu.matmul %0, %1, %cst {dimension_numbers = #tpu.dot_dimension_numbers<[1], [0], [0], [1], [0, 0, 1, 1], [], []>} : vector<16x32xf32>, vector<32x384xf32>, vector<16x384xf32> -> vector<16x384xf32>
    %c0_3 = arith.constant 0 : index
    %c0_4 = arith.constant 0 : index
    %3 = vector.load %arg3[%c0_3, %c0_4] : memref<1x384xf32, #tpu.memory_space<vmem>>, vector<1x384xf32>
    %4 = vector.broadcast %3 : vector<1x384xf32> to vector<16x384xf32>
    %5 = arith.addf %2, %4 : vector<16x384xf32>
    %6 = vector.extract_strided_slice %5 {offsets = [0, 0], sizes = [16, 32], strides = [1, 1]} : vector<16x384xf32> to vector<16x32xf32>
    %7 = vector.shape_cast %6 : vector<16x32xf32> to vector<2x8x32xf32>
    %8 = vector.extract_strided_slice %5 {offsets = [0, 128], sizes = [16, 32], strides = [1, 1]} : vector<16x384xf32> to vector<16x32xf32>
    %9 = vector.shape_cast %8 : vector<16x32xf32> to vector<2x8x32xf32>
    %10 = vector.extract_strided_slice %5 {offsets = [0, 256], sizes = [16, 32], strides = [1, 1]} : vector<16x384xf32> to vector<16x32xf32>
    %11 = vector.shape_cast %10 : vector<16x32xf32> to vector<2x8x32xf32>
    %12 = tpu.iota {dimensions = array<i32: 0>} : vector<8x8xi32>
    %13 = tpu.iota {dimensions = array<i32: 1>} : vector<8x8xi32>
    %14 = arith.cmpi sge, %12, %13 : vector<8x8xi32>
    %15 = vector.shape_cast %14 : vector<8x8xi1> to vector<1x8x8xi1>
    "tpu.trace_start"() <{level = 10 : i32, message = "btc,bsc->bts"}> : () -> ()
    %cst_5 = arith.constant dense<0.000000e+00> : vector<2x8x8xf32>
    %16 = tpu.matmul %7, %9, %cst_5 {dimension_numbers = #tpu.dot_dimension_numbers<[2], [2], [1], [1], [0, 0, 0, 1, 1, 1], [0], [0]>} : vector<2x8x32xf32>, vector<2x8x32xf32>, vector<2x8x8xf32> -> vector<2x8x8xf32>
    %cst_6 = arith.constant -1.000000e+30 : f32
    "tpu.trace_stop"() : () -> ()
    %17 = vector.shape_cast %15 : vector<1x8x8xi1> to vector<1x8x8xi1>
    %18 = vector.broadcast %17 : vector<1x8x8xi1> to vector<2x8x8xi1>
    %19 = vector.broadcast %cst_6 : f32 to vector<2x8x8xf32>
    %20 = arith.select %18, %16, %19 : vector<2x8x8xi1>, vector<2x8x8xf32>
    %cst_7 = arith.constant dense<0xFF800000> : vector<2x8xf32>
    %21 = vector.multi_reduction <maximumf>, %20, %cst_7 [2] : vector<2x8x8xf32> to vector<2x8xf32>
    %22 = vector.shape_cast %21 : vector<2x8xf32> to vector<2x8x1xf32>
    %23 = vector.broadcast %22 : vector<2x8x1xf32> to vector<2x8x8xf32>
    %24 = arith.subf %20, %23 : vector<2x8x8xf32>
    %25 = math.exp %24 : vector<2x8x8xf32>
    %cst_8 = arith.constant dense<0.000000e+00> : vector<2x8xf32>
    %26 = vector.multi_reduction <add>, %25, %cst_8 [2] : vector<2x8x8xf32> to vector<2x8xf32>
    %27 = vector.shape_cast %26 : vector<2x8xf32> to vector<2x8x1xf32>
    %28 = tpu.reciprocal %27 {approx = true} : vector<2x8x1xf32> -> vector<2x8x1xf32>
    %29 = arith.mulf %27, %28 : vector<2x8x1xf32>
    %cst_9 = arith.constant 2.000000e+00 : f32
    %30 = vector.broadcast %cst_9 : f32 to vector<2x8x1xf32>
    %31 = arith.subf %30, %29 : vector<2x8x1xf32>
    %32 = arith.mulf %28, %31 : vector<2x8x1xf32>
    %33 = vector.broadcast %32 : vector<2x8x1xf32> to vector<2x8x8xf32>
    %34 = arith.mulf %25, %33 : vector<2x8x8xf32>
    "tpu.trace_start"() <{level = 10 : i32, message = "bts,bsc->btc"}> : () -> ()
    %cst_10 = arith.constant dense<0.000000e+00> : vector<2x8x32xf32>
    %35 = tpu.matmul %34, %11, %cst_10 {dimension_numbers = #tpu.dot_dimension_numbers<[2], [1], [1], [2], [0, 0, 0, 1, 1, 2], [0], [0]>} : vector<2x8x8xf32>, vector<2x8x32xf32>, vector<2x8x32xf32> -> vector<2x8x32xf32>
    "tpu.trace_stop"() : () -> ()
    %c0_11 = arith.constant 0 : index
    %c0_12 = arith.constant 0 : index
    %c0_13 = arith.constant 0 : index
    %36 = vector.load %arg4[%c0_11, %c0_12, %c0_13] : memref<2x8x32xf32, #tpu.memory_space<vmem>>, vector<2x8x32xf32>
    tpu.vector_store %arg4[%c0_11, %c0_12, %c0_13], %35 {strides = array<i32>} : memref<2x8x32xf32, #tpu.memory_space<vmem>>, vector<2x8x32xf32>,
    return
  }
  func.func @transform_0(%arg0: i32) -> (i32, i32) {
    %c0_i32 = arith.constant 0 : i32
    %c0_i32_0 = arith.constant 0 : i32
    %c0_i32_1 = arith.constant 0 : i32
    return %c0_i32, %c0_i32_0 : i32, i32
  }
  func.func @transform_1(%arg0: i32) -> (i32, i32) {
    %c0_i32 = arith.constant 0 : i32
    %c0_i32_0 = arith.constant 0 : i32
    %c0_i32_1 = arith.constant 0 : i32
    return %c0_i32, %c0_i32_0 : i32, i32
  }
  func.func @transform_2(%arg0: i32) -> (i32, i32) {
    %c0_i32 = arith.constant 0 : i32
    %c0_i32_0 = arith.constant 0 : i32
    %c0_i32_1 = arith.constant 0 : i32
    return %c0_i32, %c0_i32_0 : i32, i32
  }
  func.func @transform_3(%arg0: i32) -> (i32, i32, i32) {
    %c0_i32 = arith.constant 0 : i32
    %c0_i32_0 = arith.constant 0 : i32
    %c0_i32_1 = arith.constant 0 : i32
    %c0_i32_2 = arith.constant 0 : i32
    return %c0_i32, %c0_i32_0, %c0_i32_1 : i32, i32, i32
  }
}

</mosaic_0001>

<llo_original>
// kernel: attention_forward.1
$region0: #{attention_forward.1}
  #allocation0 [shape = 'u32[]', space=smem, size = 0x4, offset = 0x4, fixed_abs, tag = 'smem constant byte address 0x4 - core index']
  #allocation1 [shape = 'u32[144,128]{1,0:T(1,128)}', space=vmem, size = 0x12000, scoped, tag = 'internal scratch']
  %s0 = inlined_call_operand.hbm [shape: f32[16,32], index: 0, kind: input, shape index: {}]
  %s1 = inlined_call_operand.hbm [shape: f32[32,384], index: 1, kind: input, shape index: {}]
  %s2 = inlined_call_operand.vmem [shape: f32[1,384], index: 2, kind: input, shape index: {}]
  %s3 = inlined_call_operand.hbm [shape: f32[2,8,32], index: 3, kind: output, shape index: {}]
  %s4 = sld [smem:[#allocation0]]
  $region30: #{attention_forward.1} parent=0
    _
  %s6 = ssub.s32 1, %s4
  %s7 = scalar_select 0, %s6, %s4
  $region1: #{attention_forward.1} parent=0
    #allocation2 [shape = 'u8[8192]{0}', space=vmem, size = 0x2000, scoped, tag = 'input window, operand 0, single buffered']
    #allocation3 [shape = 's32[1]{0}', space=sflag, size = 0x4, scoped, tag = 'scoped memory for attention_forward.1']
    #allocation4 [shape = 's32[1]{0}', space=sflag, size = 0x4, scoped, tag = 'scoped memory for attention_forward.1']
    #allocation5 [shape = 'u8[49152]{0}', space=vmem, size = 0xc000, scoped, tag = 'input window, operand 1, single buffered']
    #allocation6 [shape = 's32[1]{0}', space=sflag, size = 0x4, scoped, tag = 'scoped memory for attention_forward.1']
    #allocation7 [shape = 'u8[8192]{0}', space=vmem, size = 0x2000, scoped, tag = 'output window, operand 0, single buffered']
    %8 = vsyncpa [#allocation3], 0
    %9 = vsyncpa [#allocation6], 0
    %10 = vsyncpa [#allocation4], 0
    // Predicated region
    $region2: #{attention_forward.1} parent=1 // pred_check
      _
    $region3: #{attention_forward.1} parent=1 // pred_check_branch
      %12 = sbr.rel (0) target = $region5
    $region4: #{attention_forward.1} parent=1 // pred_region
      %s14 = ssub.s32 256, 256
      %15 = vsyncadd [#allocation3], %s14
      %s16 = sshll.u32 [#allocation2], 4
      %s17 = int_to_ptr.vmem [resolvable:$true] %s16
      %22 = dma.hbm_to_vmem [thread:$0]  %s0, 256, %s17, [#allocation3], 128, 128, 8
    $region5: #{attention_forward.1} parent=1 // pred_fallthru
      _
    // Predicated region
    $region6: #{attention_forward.1} parent=1 // pred_check
      _
    $region7: #{attention_forward.1} parent=1 // pred_check_branch
      %24 = sbr.rel (0) target = $region9
    $region8: #{attention_forward.1} parent=1 // pred_region
      %s26 = ssub.s32 1536, 1536
      %27 = vsyncadd [#allocation6], %s26
      %s28 = sshll.u32 [#allocation5], 4
      %s29 = int_to_ptr.vmem [resolvable:$true] %s28
      %34 = dma.hbm_to_vmem [thread:$0]  %s1, 1536, %s29, [#allocation6], 384, 384, 24
    $region9: #{attention_forward.1} parent=1 // pred_fallthru
      _
    // Predicated region
    $region10: #{attention_forward.1} parent=1 // pred_check
      _
    $region11: #{attention_forward.1} parent=1 // pred_check_branch
      %36 = sbr.rel (0) target = $region13
    $region12: #{attention_forward.1} parent=1 // pred_region
      _
    $region13: #{attention_forward.1} parent=1 // pred_fallthru
      _
    // Predicated region
    $region14: #{attention_forward.1} parent=1 // pred_check
      _
    $region15: #{attention_forward.1} parent=1 // pred_check_branch
      %38 = sbr.rel (0) target = $region17
    $region16: #{attention_forward.1} parent=1 // pred_region
      %39 = dma.done [#allocation3], 256
    $region17: #{attention_forward.1} parent=1 // pred_fallthru
      _
    // Predicated region
    $region18: #{attention_forward.1} parent=1 // pred_check
      _
    $region19: #{attention_forward.1} parent=1 // pred_check_branch
      %41 = sbr.rel (0) target = $region21
    $region20: #{attention_forward.1} parent=1 // pred_region
      %42 = dma.done [#allocation6], 1536
    $region21: #{attention_forward.1} parent=1 // pred_fallthru
      _
    %v43 = vld [vmem:[#allocation2] sm:$0xff]
    %v44 = vld [vmem:[#allocation2 + $0x8] sm:$0xff]
    %v45 = vld [vmem:[#allocation5] sm:$0xff]
    %v46 = vld [vmem:[#allocation5 + $0x8] sm:$0xff]
    %v47 = vld [vmem:[#allocation5 + $0x10] sm:$0xff]
    %v48 = vld [vmem:[#allocation5 + $0x18] sm:$0xff]
    %v49 = vld [vmem:[#allocation5 + $0x20] sm:$0xff]
    %v50 = vld [vmem:[#allocation5 + $0x28] sm:$0xff]
    %v51 = vld [vmem:[#allocation5 + $0x30] sm:$0xff]
    %v52 = vld [vmem:[#allocation5 + $0x38] sm:$0xff]
    %v53 = vld [vmem:[#allocation5 + $0x40] sm:$0xff]
    %v54 = vld [vmem:[#allocation5 + $0x48] sm:$0xff]
    %v55 = vld [vmem:[#allocation5 + $0x50] sm:$0xff]
    %v56 = vld [vmem:[#allocation5 + $0x58] sm:$0xff]
    %v57 = vld [vmem:[%s2] sm:$0x7]
    %v59 = vlaneseq
    %v60 = vshrl.u32 %v59, 7
    %v61 = vsub.s32 0, %v60
    %v62 = vrot.slane %v57, %v61
    %v63 = vlaneseq
    %v64 = vshrl.u32 %v63, 7
    %v65 = vsub.s32 1, %v64
    %v66 = vrot.slane %v57, %v65
    %v67 = vlaneseq
    %v68 = vshrl.u32 %v67, 7
    %v69 = vsub.s32 2, %v68
    %v70 = vrot.slane %v57, %v69
    %vm74 = vcmask 261120
    %v76 = vsel %vm74, %v43, 0
    %v79 = vsel %vm74, %v44, 0
    %81 = vmatprep.subr.mxu0 %v46
    %82 = vmatpush1.msra.mxu0 %v45
    %83 = vmatprep.subr.mxu0 %v49
    %84 = vmatpush1.msra.mxu0 %v48
    %85 = vmatprep.subr.mxu0 %v52
    %86 = vmatpush1.msra.mxu0 %v51
    %87 = vmatprep.subr.mxu0 %v55
    %88 = vmatpush1.msra.mxu0 %v54
    %89 = vmatprep.subr.mxu0 0.0
    %90 = vmatpush1.msra.mxu0 0.0
    %91 = vmatprep.subr.mxu0 0.0
    %92 = vmatpush1.msra.mxu0 0.0
    %93 = vmatprep.subr.mxu0 0.0
    %94 = vmatpush1.msra.mxu0 0.0
    %95 = vmatprep.subr.mxu0 0.0
    %96 = vmatpush1.msra.mxu0 0.0
    %97 = vmatprep.subr.mxu0 0.0
    %98 = vmatpush1.msra.mxu0 0.0
    %99 = vmatprep.subr.mxu0 0.0
    %100 = vmatpush1.msra.mxu0 0.0
    %101 = vmatprep.subr.mxu0 0.0
    %102 = vmatpush1.msra.mxu0 0.0
    %103 = vmatprep.subr.mxu0 0.0
    %104 = vmatpush1.msra.mxu0 0.0
    %105 = vmatprep.subr.mxu0 0.0
    %106 = vmatpush1.msra.mxu0 0.0
    %107 = vmatprep.subr.mxu0 0.0
    %108 = vmatpush1.msra.mxu0 0.0
    %109 = vmatprep.subr.mxu0 0.0
    %110 = vmatpush1.msra.mxu0 0.0
    %111 = vmatprep.subr.mxu0 0.0
    %112 = vmatpush1.msra.mxu0 0.0
    %113 = vmatprep.subr.mxu0 0.0
    %114 = vmatpush1.msra.mxu0 0.0
    %115 = vmatprep.subr.mxu0 0.0
    %116 = vmatpush1.msra.mxu0 0.0
    %117 = vmatprep.subr.mxu0 0.0
    %118 = vmatpush1.msra.mxu0 0.0
    %119 = vmatprep.subr.mxu0 0.0
    %120 = vmatpush1.msra.mxu0 0.0
    %121 = vmatprep.subr.mxu0 0.0
    %122 = vmatpush1.msra.mxu0 0.0
    %123 = vmatprep.subr.mxu0 0.0
    %124 = vmatpush1.msra.mxu0 0.0
    %125 = vmatprep.subr.mxu0 0.0
    %126 = vmatpush1.msra.mxu0 0.0
    %127 = vmatprep.subr.mxu0 0.0
    %128 = vmatpush1.msra.mxu0 0.0
    %129 = vmatprep.subr.mxu0 0.0
    %130 = vmatpush1.msra.mxu0 0.0
    %131 = vmatprep.subr.mxu0 0.0
    %132 = vmatpush1.msra.mxu0 0.0
    %133 = vmatprep.subr.mxu0 0.0
    %134 = vmatpush1.msra.mxu0 0.0
    %135 = vmatprep.subr.mxu0 0.0
    %136 = vmatpush1.msra.mxu0 0.0
    %137 = vmatprep.subr.mxu0 0.0
    %138 = vmatpush1.msra.mxu0 0.0
    %139 = vmatprep.subr.mxu0 0.0
    %140 = vmatpush1.msra.mxu0 0.0
    %141 = vmatprep.subr.mxu0 0.0
    %142 = vmatpush1.msra.mxu0 0.0
    %143 = vmatprep.subr.mxu0 0.0
    %144 = vmatpush1.msra.mxu0 0.0
    %145 = vmatprep.mubr.f32.mxu0 0.0
    %146 = vmatmul.mubr.f32.gmra.mrb[0].mxu0 %v76
    %v147 = vpop.f32.mrb[0].mxu0
    %v148 = vadd.f32 %v62, %v147
    %v149 = vpop.f32.mrb[0].mxu0
    %v150 = vadd.f32 %v66, %v149
    %151 = vmatprep.mubr.f32.mxu0 0.0
    %152 = vmatmul.mubr.f32.gmra.mrb[0].mxu0 %v79
    %v153 = vpop.f32.mrb[0].mxu0
    %v154 = vadd.f32 %v62, %v153
    %v155 = vpop.f32.mrb[0].mxu0
    %v156 = vadd.f32 %v66, %v155
    %157 = vdwg.mxu0
    %158 = vmatprep.subr.mxu0 0.0
    %159 = vmatpush1.msra.mxu0 %v47
    %160 = vmatprep.subr.mxu0 0.0
    %161 = vmatpush1.msra.mxu0 %v50
    %162 = vmatprep.subr.mxu0 0.0
    %163 = vmatpush1.msra.mxu0 %v53
    %164 = vmatprep.subr.mxu0 0.0
    %165 = vmatpush1.msra.mxu0 %v56
    %166 = vmatprep.subr.mxu0 0.0
    %167 = vmatpush1.msra.mxu0 0.0
    %168 = vmatprep.subr.mxu0 0.0
    %169 = vmatpush1.msra.mxu0 0.0
    %170 = vmatprep.subr.mxu0 0.0
    %171 = vmatpush1.msra.mxu0 0.0
    %172 = vmatprep.subr.mxu0 0.0
    %173 = vmatpush1.msra.mxu0 0.0
    %174 = vmatprep.subr.mxu0 0.0
    %175 = vmatpush1.msra.mxu0 0.0
    %176 = vmatprep.subr.mxu0 0.0
    %177 = vmatpush1.msra.mxu0 0.0
    %178 = vmatprep.subr.mxu0 0.0
    %179 = vmatpush1.msra.mxu0 0.0
    %180 = vmatprep.subr.mxu0 0.0
    %181 = vmatpush1.msra.mxu0 0.0
    %182 = vmatprep.subr.mxu0 0.0
    %183 = vmatpush1.msra.mxu0 0.0
    %184 = vmatprep.subr.mxu0 0.0
    %185 = vmatpush1.msra.mxu0 0.0
    %186 = vmatprep.subr.mxu0 0.0
    %187 = vmatpush1.msra.mxu0 0.0
    %188 = vmatprep.subr.mxu0 0.0
    %189 = vmatpush1.msra.mxu0 0.0
    %190 = vmatprep.subr.mxu0 0.0
    %191 = vmatpush1.msra.mxu0 0.0
    %192 = vmatprep.subr.mxu0 0.0
    %193 = vmatpush1.msra.mxu0 0.0
    %194 = vmatprep.subr.mxu0 0.0
    %195 = vmatpush1.msra.mxu0 0.0
    %196 = vmatprep.subr.mxu0 0.0
    %197 = vmatpush1.msra.mxu0 0.0
    %198 = vmatprep.subr.mxu0 0.0
    %199 = vmatpush1.msra.mxu0 0.0
    %200 = vmatprep.subr.mxu0 0.0
    %201 = vmatpush1.msra.mxu0 0.0
    %202 = vmatprep.subr.mxu0 0.0
    %203 = vmatpush1.msra.mxu0 0.0
    %204 = vmatprep.subr.mxu0 0.0
    %205 = vmatpush1.msra.mxu0 0.0
    %206 = vmatprep.subr.mxu0 0.0
    %207 = vmatpush1.msra.mxu0 0.0
    %208 = vmatprep.subr.mxu0 0.0
    %209 = vmatpush1.msra.mxu0 0.0
    %210 = vmatprep.subr.mxu0 0.0
    %211 = vmatpush1.msra.mxu0 0.0
    %212 = vmatprep.subr.mxu0 0.0
    %213 = vmatpush1.msra.mxu0 0.0
    %214 = vmatprep.subr.mxu0 0.0
    %215 = vmatpush1.msra.mxu0 0.0
    %216 = vmatprep.subr.mxu0 0.0
    %217 = vmatpush1.msra.mxu0 0.0
    %218 = vmatprep.subr.mxu0 0.0
    %219 = vmatpush1.msra.mxu0 0.0
    %220 = vmatprep.subr.mxu0 0.0
    %221 = vmatpush1.msra.mxu0 0.0
    %222 = vmatprep.mubr.f32.mxu0 0.0
    %223 = vmatmul.mubr.f32.gmra.mrb[0].mxu0 %v76
    %v224 = vpop.f32.mrb[0].mxu0
    %v225 = vadd.f32 %v70, %v224
    %v226 = vpop.f32.mrb[0].mxu0
    %227 = vmatprep.mubr.f32.mxu0 0.0
    %228 = vmatmul.mubr.f32.gmra.mrb[0].mxu0 %v79
    %v229 = vpop.f32.mrb[0].mxu0
    %v230 = vadd.f32 %v70, %v229
    %v231 = vpop.f32.mrb[0].mxu0
    %232 = vdwg.mxu0
    %v233 = vlaneseq
    %v234 = vshrl.u32 %v233, 7
    %v235 = vlaneseq
    %v236 = vand.u32 %v235, 127
    %vm237 = vcmp.ge.s32.totalorder %v234, %v236
    %v239 = vsel %vm74, %v148, 0
    %v242 = vsel %vm74, %v150, 0
    %244 = vmatprep.subr.mxu0 0.0
    %245 = vmatpush1.xpose.msra.mxu0 %v242
    %246 = vmatprep.subr.mxu0 0.0
    %247 = vmatpush1.xpose.msra.mxu0 0.0
    %248 = vmatprep.subr.mxu0 0.0
    %249 = vmatpush1.xpose.msra.mxu0 0.0
    %250 = vmatprep.subr.mxu0 0.0
    %251 = vmatpush1.xpose.msra.mxu0 0.0
    %252 = vmatprep.subr.mxu0 0.0
    %253 = vmatpush1.xpose.msra.mxu0 0.0
    %254 = vmatprep.subr.mxu0 0.0
    %255 = vmatpush1.xpose.msra.mxu0 0.0
    %256 = vmatprep.subr.mxu0 0.0
    %257 = vmatpush1.xpose.msra.mxu0 0.0
    %258 = vmatprep.subr.mxu0 0.0
    %259 = vmatpush1.xpose.msra.mxu0 0.0
    %260 = vmatprep.subr.mxu0 0.0
    %261 = vmatpush1.xpose.msra.mxu0 0.0
    %262 = vmatprep.subr.mxu0 0.0
    %263 = vmatpush1.xpose.msra.mxu0 0.0
    %264 = vmatprep.subr.mxu0 0.0
    %265 = vmatpush1.xpose.msra.mxu0 0.0
    %266 = vmatprep.subr.mxu0 0.0
    %267 = vmatpush1.xpose.msra.mxu0 0.0
    %268 = vmatprep.subr.mxu0 0.0
    %269 = vmatpush1.xpose.msra.mxu0 0.0
    %270 = vmatprep.subr.mxu0 0.0
    %271 = vmatpush1.xpose.msra.mxu0 0.0
    %272 = vmatprep.subr.mxu0 0.0
    %273 = vmatpush1.xpose.msra.mxu0 0.0
    %274 = vmatprep.subr.mxu0 0.0
    %275 = vmatpush1.xpose.msra.mxu0 0.0
    %276 = vmatprep.subr.mxu0 0.0
    %277 = vmatpush1.xpose.msra.mxu0 0.0
    %278 = vmatprep.subr.mxu0 0.0
    %279 = vmatpush1.xpose.msra.mxu0 0.0
    %280 = vmatprep.subr.mxu0 0.0
    %281 = vmatpush1.xpose.msra.mxu0 0.0
    %282 = vmatprep.subr.mxu0 0.0
    %283 = vmatpush1.xpose.msra.mxu0 0.0
    %284 = vmatprep.subr.mxu0 0.0
    %285 = vmatpush1.xpose.msra.mxu0 0.0
    %286 = vmatprep.subr.mxu0 0.0
    %287 = vmatpush1.xpose.msra.mxu0 0.0
    %288 = vmatprep.subr.mxu0 0.0
    %289 = vmatpush1.xpose.msra.mxu0 0.0
    %290 = vmatprep.subr.mxu0 0.0
    %291 = vmatpush1.xpose.msra.mxu0 0.0
    %292 = vmatprep.subr.mxu0 0.0
    %293 = vmatpush1.xpose.msra.mxu0 0.0
    %294 = vmatprep.subr.mxu0 0.0
    %295 = vmatpush1.xpose.msra.mxu0 0.0
    %296 = vmatprep.subr.mxu0 0.0
    %297 = vmatpush1.xpose.msra.mxu0 0.0
    %298 = vmatprep.subr.mxu0 0.0
    %299 = vmatpush1.xpose.msra.mxu0 0.0
    %300 = vmatprep.subr.mxu0 0.0
    %301 = vmatpush1.xpose.msra.mxu0 0.0
    %302 = vmatprep.subr.mxu0 0.0
    %303 = vmatpush1.xpose.msra.mxu0 0.0
    %304 = vmatprep.subr.mxu0 0.0
    %305 = vmatpush1.xpose.msra.mxu0 0.0
    %306 = vmatprep.subr.mxu0 0.0
    %307 = vmatpush1.xpose.msra.mxu0 0.0
    %308 = vmatprep.mubr.f32.mxu0 0.0
    %309 = vmatmul.mubr.f32.gmra.mrb[0].mxu0 %v239
    %v310 = vpop.f32.mrb[0].mxu0
    %v311 = vadd.f32 0.0, %v310
    %v312 = vpop.f32.mrb[0].mxu0
    %313 = vdwg.mxu0
    %v315 = vsel %vm74, %v154, 0
    %v318 = vsel %vm74, %v156, 0
    %320 = vmatprep.subr.mxu0 0.0
    %321 = vmatpush1.xpose.msra.mxu0 %v318
    %322 = vmatprep.subr.mxu0 0.0
    %323 = vmatpush1.xpose.msra.mxu0 0.0
    %324 = vmatprep.subr.mxu0 0.0
    %325 = vmatpush1.xpose.msra.mxu0 0.0
    %326 = vmatprep.subr.mxu0 0.0
    %327 = vmatpush1.xpose.msra.mxu0 0.0
    %328 = vmatprep.subr.mxu0 0.0
    %329 = vmatpush1.xpose.msra.mxu0 0.0
    %330 = vmatprep.subr.mxu0 0.0
    %331 = vmatpush1.xpose.msra.mxu0 0.0
    %332 = vmatprep.subr.mxu0 0.0
    %333 = vmatpush1.xpose.msra.mxu0 0.0
    %334 = vmatprep.subr.mxu0 0.0
    %335 = vmatpush1.xpose.msra.mxu0 0.0
    %336 = vmatprep.subr.mxu0 0.0
    %337 = vmatpush1.xpose.msra.mxu0 0.0
    %338 = vmatprep.subr.mxu0 0.0
    %339 = vmatpush1.xpose.msra.mxu0 0.0
    %340 = vmatprep.subr.mxu0 0.0
    %341 = vmatpush1.xpose.msra.mxu0 0.0
    %342 = vmatprep.subr.mxu0 0.0
    %343 = vmatpush1.xpose.msra.mxu0 0.0
    %344 = vmatprep.subr.mxu0 0.0
    %345 = vmatpush1.xpose.msra.mxu0 0.0
    %346 = vmatprep.subr.mxu0 0.0
    %347 = vmatpush1.xpose.msra.mxu0 0.0
    %348 = vmatprep.subr.mxu0 0.0
    %349 = vmatpush1.xpose.msra.mxu0 0.0
    %350 = vmatprep.subr.mxu0 0.0
    %351 = vmatpush1.xpose.msra.mxu0 0.0
    %352 = vmatprep.subr.mxu0 0.0
    %353 = vmatpush1.xpose.msra.mxu0 0.0
    %354 = vmatprep.subr.mxu0 0.0
    %355 = vmatpush1.xpose.msra.mxu0 0.0
    %356 = vmatprep.subr.mxu0 0.0
    %357 = vmatpush1.xpose.msra.mxu0 0.0
    %358 = vmatprep.subr.mxu0 0.0
    %359 = vmatpush1.xpose.msra.mxu0 0.0
    %360 = vmatprep.subr.mxu0 0.0
    %361 = vmatpush1.xpose.msra.mxu0 0.0
    %362 = vmatprep.subr.mxu0 0.0
    %363 = vmatpush1.xpose.msra.mxu0 0.0
    %364 = vmatprep.subr.mxu0 0.0
    %365 = vmatpush1.xpose.msra.mxu0 0.0
    %366 = vmatprep.subr.mxu0 0.0
    %367 = vmatpush1.xpose.msra.mxu0 0.0
    %368 = vmatprep.subr.mxu0 0.0
    %369 = vmatpush1.xpose.msra.mxu0 0.0
    %370 = vmatprep.subr.mxu0 0.0
    %371 = vmatpush1.xpose.msra.mxu0 0.0
    %372 = vmatprep.subr.mxu0 0.0
    %373 = vmatpush1.xpose.msra.mxu0 0.0
    %374 = vmatprep.subr.mxu0 0.0
    %375 = vmatpush1.xpose.msra.mxu0 0.0
    %376 = vmatprep.subr.mxu0 0.0
    %377 = vmatpush1.xpose.msra.mxu0 0.0
    %378 = vmatprep.subr.mxu0 0.0
    %379 = vmatpush1.xpose.msra.mxu0 0.0
    %380 = vmatprep.subr.mxu0 0.0
    %381 = vmatpush1.xpose.msra.mxu0 0.0
    %382 = vmatprep.subr.mxu0 0.0
    %383 = vmatpush1.xpose.msra.mxu0 0.0
    %384 = vmatprep.mubr.f32.mxu0 0.0
    %385 = vmatmul.mubr.f32.gmra.mrb[0].mxu0 %v315
    %v386 = vpop.f32.mrb[0].mxu0
    %v387 = vadd.f32 0.0, %v386
    %v388 = vpop.f32.mrb[0].mxu0
    %389 = vdwg.mxu0
    %v390 = vsel %vm237, 1, 0
    %vm391 = vcmp.eq.s32.totalorder %v390, 1
    %v392 = vsel %vm391, %v311, -1e+30
    %v393 = vsel %vm391, %v387, -1e+30
    %vm394 = vcmask 64512
    %v395 = vsel %vm394, %v392, -inf
    %396 = vmax.xlane.f32.xlu0 %v395
    %v397 = vpop.xlane.xlu0 %396
    %v398 = vsel %vm394, %v393, -inf
    %399 = vmax.xlane.f32.xlu0 %v398
    %v400 = vpop.xlane.xlu0 %399
    %v401 = vsub.f32 %v392, %v397
    %v402 = vsub.f32 %v393, %v400
    %v403 = vmul.f32 %v401, 1.442695
    %v404 = vpow.pop %v403
    %v405 = vmul.f32 %v402, 1.442695
    %v406 = vpow.pop %v405
    %v407 = vsel %vm394, %v404, 0.0
    %408 = vadd.xlane.f32.xlu0 %v407
    %v409 = vpop.xlane.xlu0 %408
    %v410 = vsel %vm394, %v406, 0.0
    %411 = vadd.xlane.f32.xlu0 %v410
    %v412 = vpop.xlane.xlu0 %411
    %v413 = vrcp.pop %v409
    %v414 = vrcp.pop %v412
    %v415 = vmul.f32 %v409, %v413
    %v416 = vmul.f32 %v412, %v414
    %v417 = vsub.f32 2.0, %v415
    %v418 = vsub.f32 2.0, %v416
    %v419 = vmul.f32 %v413, %v417
    %v420 = vmul.f32 %v414, %v418
    %v421 = vmul.f32 %v404, %v419
    %v422 = vmul.f32 %v406, %v420
    %v424 = vsel %vm394, %v421, 0
    %426 = vmatprep.subr.mxu0 0.0
    %427 = vmatpush1.msra.mxu0 %v225
    %428 = vmatprep.subr.mxu0 0.0
    %429 = vmatpush1.msra.mxu0 0.0
    %430 = vmatprep.subr.mxu0 0.0
    %431 = vmatpush1.msra.mxu0 0.0
    %432 = vmatprep.subr.mxu0 0.0
    %433 = vmatpush1.msra.mxu0 0.0
    %434 = vmatprep.subr.mxu0 0.0
    %435 = vmatpush1.msra.mxu0 0.0
    %436 = vmatprep.subr.mxu0 0.0
    %437 = vmatpush1.msra.mxu0 0.0
    %438 = vmatprep.subr.mxu0 0.0
    %439 = vmatpush1.msra.mxu0 0.0
    %440 = vmatprep.subr.mxu0 0.0
    %441 = vmatpush1.msra.mxu0 0.0
    %442 = vmatprep.subr.mxu0 0.0
    %443 = vmatpush1.msra.mxu0 0.0
    %444 = vmatprep.subr.mxu0 0.0
    %445 = vmatpush1.msra.mxu0 0.0
    %446 = vmatprep.subr.mxu0 0.0
    %447 = vmatpush1.msra.mxu0 0.0
    %448 = vmatprep.subr.mxu0 0.0
    %449 = vmatpush1.msra.mxu0 0.0
    %450 = vmatprep.subr.mxu0 0.0
    %451 = vmatpush1.msra.mxu0 0.0
    %452 = vmatprep.subr.mxu0 0.0
    %453 = vmatpush1.msra.mxu0 0.0
    %454 = vmatprep.subr.mxu0 0.0
    %455 = vmatpush1.msra.mxu0 0.0
    %456 = vmatprep.subr.mxu0 0.0
    %457 = vmatpush1.msra.mxu0 0.0
    %458 = vmatprep.subr.mxu0 0.0
    %459 = vmatpush1.msra.mxu0 0.0
    %460 = vmatprep.subr.mxu0 0.0
    %461 = vmatpush1.msra.mxu0 0.0
    %462 = vmatprep.subr.mxu0 0.0
    %463 = vmatpush1.msra.mxu0 0.0
    %464 = vmatprep.subr.mxu0 0.0
    %465 = vmatpush1.msra.mxu0 0.0
    %466 = vmatprep.subr.mxu0 0.0
    %467 = vmatpush1.msra.mxu0 0.0
    %468 = vmatprep.subr.mxu0 0.0
    %469 = vmatpush1.msra.mxu0 0.0
    %470 = vmatprep.subr.mxu0 0.0
    %471 = vmatpush1.msra.mxu0 0.0
    %472 = vmatprep.subr.mxu0 0.0
    %473 = vmatpush1.msra.mxu0 0.0
    %474 = vmatprep.subr.mxu0 0.0
    %475 = vmatpush1.msra.mxu0 0.0
    %476 = vmatprep.subr.mxu0 0.0
    %477 = vmatpush1.msra.mxu0 0.0
    %478 = vmatprep.subr.mxu0 0.0
    %479 = vmatpush1.msra.mxu0 0.0
    %480 = vmatprep.subr.mxu0 0.0
    %481 = vmatpush1.msra.mxu0 0.0
    %482 = vmatprep.subr.mxu0 0.0
    %483 = vmatpush1.msra.mxu0 0.0
    %484 = vmatprep.subr.mxu0 0.0
    %485 = vmatpush1.msra.mxu0 0.0
    %486 = vmatprep.subr.mxu0 0.0
    %487 = vmatpush1.msra.mxu0 0.0
    %488 = vmatprep.subr.mxu0 0.0
    %489 = vmatpush1.msra.mxu0 0.0
    %490 = vmatprep.mubr.f32.mxu0 0.0
    %491 = vmatmul.mubr.f32.gmra.mrb[0].mxu0 %v424
    %v492 = vpop.f32.mrb[0].mxu0
    %v493 = vadd.f32 0.0, %v492
    %v494 = vpop.f32.mrb[0].mxu0
    %495 = vdwg.mxu0
    %v497 = vsel %vm394, %v422, 0
    %499 = vmatprep.subr.mxu0 0.0
    %500 = vmatpush1.msra.mxu0 %v230
    %501 = vmatprep.subr.mxu0 0.0
    %502 = vmatpush1.msra.mxu0 0.0
    %503 = vmatprep.subr.mxu0 0.0
    %504 = vmatpush1.msra.mxu0 0.0
    %505 = vmatprep.subr.mxu0 0.0
    %506 = vmatpush1.msra.mxu0 0.0
    %507 = vmatprep.subr.mxu0 0.0
    %508 = vmatpush1.msra.mxu0 0.0
    %509 = vmatprep.subr.mxu0 0.0
    %510 = vmatpush1.msra.mxu0 0.0
    %511 = vmatprep.subr.mxu0 0.0
    %512 = vmatpush1.msra.mxu0 0.0
    %513 = vmatprep.subr.mxu0 0.0
    %514 = vmatpush1.msra.mxu0 0.0
    %515 = vmatprep.subr.mxu0 0.0
    %516 = vmatpush1.msra.mxu0 0.0
    %517 = vmatprep.subr.mxu0 0.0
    %518 = vmatpush1.msra.mxu0 0.0
    %519 = vmatprep.subr.mxu0 0.0
    %520 = vmatpush1.msra.mxu0 0.0
    %521 = vmatprep.subr.mxu0 0.0
    %522 = vmatpush1.msra.mxu0 0.0
    %523 = vmatprep.subr.mxu0 0.0
    %524 = vmatpush1.msra.mxu0 0.0
    %525 = vmatprep.subr.mxu0 0.0
    %526 = vmatpush1.msra.mxu0 0.0
    %527 = vmatprep.subr.mxu0 0.0
    %528 = vmatpush1.msra.mxu0 0.0
    %529 = vmatprep.subr.mxu0 0.0
    %530 = vmatpush1.msra.mxu0 0.0
    %531 = vmatprep.subr.mxu0 0.0
    %532 = vmatpush1.msra.mxu0 0.0
    %533 = vmatprep.subr.mxu0 0.0
    %534 = vmatpush1.msra.mxu0 0.0
    %535 = vmatprep.subr.mxu0 0.0
    %536 = vmatpush1.msra.mxu0 0.0
    %537 = vmatprep.subr.mxu0 0.0
    %538 = vmatpush1.msra.mxu0 0.0
    %539 = vmatprep.subr.mxu0 0.0
    %540 = vmatpush1.msra.mxu0 0.0
    %541 = vmatprep.subr.mxu0 0.0
    %542 = vmatpush1.msra.mxu0 0.0
    %543 = vmatprep.subr.mxu0 0.0
    %544 = vmatpush1.msra.mxu0 0.0
    %545 = vmatprep.subr.mxu0 0.0
    %546 = vmatpush1.msra.mxu0 0.0
    %547 = vmatprep.subr.mxu0 0.0
    %548 = vmatpush1.msra.mxu0 0.0
    %549 = vmatprep.subr.mxu0 0.0
    %550 = vmatpush1.msra.mxu0 0.0
    %551 = vmatprep.subr.mxu0 0.0
    %552 = vmatpush1.msra.mxu0 0.0
    %553 = vmatprep.subr.mxu0 0.0
    %554 = vmatpush1.msra.mxu0 0.0
    %555 = vmatprep.subr.mxu0 0.0
    %556 = vmatpush1.msra.mxu0 0.0
    %557 = vmatprep.subr.mxu0 0.0
    %558 = vmatpush1.msra.mxu0 0.0
    %559 = vmatprep.subr.mxu0 0.0
    %560 = vmatpush1.msra.mxu0 0.0
    %561 = vmatprep.subr.mxu0 0.0
    %562 = vmatpush1.msra.mxu0 0.0
    %563 = vmatprep.mubr.f32.mxu0 0.0
    %564 = vmatmul.mubr.f32.gmra.mrb[0].mxu0 %v497
    %v565 = vpop.f32.mrb[0].mxu0
    %v566 = vadd.f32 0.0, %v565
    %v567 = vpop.f32.mrb[0].mxu0
    %568 = vdwg.mxu0
    %569 = vst.msk [vmem:[#allocation7] sm:$0xff] %vm74, %v493
    %570 = vst.msk [vmem:[#allocation7 + $0x8] sm:$0xff] %vm74, %v566
    // Predicated region
    $region22: #{attention_forward.1} parent=1 // pred_check
      _
    $region23: #{attention_forward.1} parent=1 // pred_check_branch
      %572 = sbr.rel (0) target = $region25
    $region24: #{attention_forward.1} parent=1 // pred_region
      %s574 = ssub.s32 256, 256
      %575 = vsyncadd [#allocation4], %s574
      %s576 = sshll.u32 [#allocation7], 4
      %s577 = int_to_ptr.vmem [resolvable:$true] %s576
      %582 = dma.vmem_to_hbm [thread:$0]  %s577, 256, %s3, [#allocation4], 128, 128, 8
    $region25: #{attention_forward.1} parent=1 // pred_fallthru
      _
    // Predicated region
    $region26: #{attention_forward.1} parent=1 // pred_check
      _
    $region27: #{attention_forward.1} parent=1 // pred_check_branch
      %584 = sbr.rel (0) target = $region29
    $region28: #{attention_forward.1} parent=1 // pred_region
      %585 = dma.done [#allocation4], 256
    $region29: #{attention_forward.1} parent=1 // pred_fallthru
      _
    %586 = vsyncpa [#allocation3], 1
    %587 = vsyncpa [#allocation6], 1
    %588 = vsyncpa [#allocation4], 1

</llo_original>
